<compile_context>
chip_gen: v7x
topology: tpu7x:2x2x1
jax: 0.10.0
libtpu: 0.0.40
codegen_flags: <defaults>
</compile_context>

<pallas_src>
import functools

import jax
import jax.numpy as jnp
from jax import lax
from jax.experimental import pallas as pl
from jax.experimental.pallas import tpu as pltpu

LANES = 128
SUBLANES = 8


def _huber_sum_kernel(pred_ref, targ_ref, out_ref, *, beta, rows, block_rows,
                      s_steps, mask_start, needs_mask):
    c = pl.program_id(0)   # core-split axis (size 1 on 1-TC chips)
    s = pl.program_id(1)   # "arbitrary" reduction axis

    @pl.when(s == 0)
    def _init():
        out_ref[...] = jnp.zeros_like(out_ref)

    d = pred_ref[...].astype(jnp.float32) - targ_ref[...].astype(jnp.float32)
    ad = jnp.abs(d)
    if beta > 0.0:
        # Branch-free Huber "numerator": m = min(|d|, beta), g = m*(|d|-0.5*m).
        #   |d| <  beta -> g = 0.5*d^2          (quadratic branch * beta)
        #   |d| >= beta -> g = beta*(|d|-beta/2) (linear branch   * beta)
        # The wrapper divides the final scalar sum by beta once.
        m = jnp.minimum(ad, beta)
        g = m * (ad - 0.5 * m)
    else:
        # beta == 0 degenerates to plain L1 (matches PyTorch).
        g = ad

    def _accum(x):
        # (block_rows,128) -> (block_rows/8, 8, 128); sum over the leading axis
        # is pure vreg adds into the resident (8,128) accumulator.
        out_ref[...] += x.reshape(block_rows // SUBLANES, SUBLANES, LANES).sum(axis=0)

    if needs_mask:
        blk = c * s_steps + s

        @pl.when(blk < mask_start)
        def _fast():                      # interior blocks: unmasked fast path
            _accum(g)

        @pl.when(blk >= mask_start)
        def _masked():                    # last partial block / duplicated block
            row_ids = blk * block_rows + lax.broadcasted_iota(
                jnp.int32, (block_rows, LANES), 0)
            _accum(jnp.where(row_ids < rows, g, 0.0))
    else:
        _accum(g)


def _plain_g_sum(pred, targ, beta):
    """Same 'g' accumulation as the kernel, in plain JAX (used for tiny tails)."""
    d = pred.astype(jnp.float32) - targ.astype(jnp.float32)
    ad = jnp.abs(d)
    if beta > 0.0:
        m = jnp.minimum(ad, beta)
        return jnp.sum(m * (ad - 0.5 * m))
    return jnp.sum(ad)


def _num_tensorcores():
    """2 on v7x (2 TensorCores/chip), 1 on v5e/v6e (single TC)."""
    try:
        kind = jax.devices()[0].device_kind.lower()
        if "v7" in kind:
            return 2
    except Exception:
        pass
    return 1


def _launch(pred2d, targ2d, *, rows, block_rows, beta, n_cores):
    num_blocks = pl.cdiv(rows, block_rows)
    if num_blocks < n_cores:
        n_cores = 1
    s_steps = pl.cdiv(num_blocks, n_cores)

    # Mask only the last (possibly partial) real block and any duplicated grid
    # points introduced by the core split; interior steps stay unmasked.
    last_partial = (rows % block_rows) != 0
    mask_start = num_blocks - 1 if last_partial else num_blocks
    needs_mask = mask_start < n_cores * s_steps

    if n_cores * s_steps == num_blocks:
        def in_map(c, s):
            return (c * s_steps + s, 0)
    else:
        # Clamp duplicated grid points to a valid block (masked to 0 in-kernel).
        def in_map(c, s):
            return (jnp.minimum(c * s_steps + s, num_blocks - 1), 0)

    kernel = functools.partial(
        _huber_sum_kernel,
        beta=beta, rows=rows, block_rows=block_rows,
        s_steps=s_steps, mask_start=mask_start, needs_mask=needs_mask)

    if n_cores == 2:
        dim_sem = (pltpu.CORE_PARALLEL, pltpu.ARBITRARY)
    else:
        dim_sem = ("arbitrary", "arbitrary")

    return pl.pallas_call(
        kernel,
        out_shape=jax.ShapeDtypeStruct((n_cores * SUBLANES, LANES), jnp.float32),
        grid_spec=pltpu.PrefetchScalarGridSpec(
            num_scalar_prefetch=0,
            grid=(n_cores, s_steps),
            in_specs=[
                pl.BlockSpec((block_rows, LANES), in_map),
                pl.BlockSpec((block_rows, LANES), in_map),
            ],
            out_specs=pl.BlockSpec((SUBLANES, LANES), lambda c, s: (c, 0)),
        ),
        compiler_params=pltpu.CompilerParams(
            dimension_semantics=dim_sem,
            vmem_limit_bytes=32 * 1024 * 1024,
        ),
    )(pred2d, targ2d)


def smooth_huber_loss(pred, target, beta=1.0, block_rows=4096):
    assert pred.shape == target.shape, "pred/target must have identical shapes"
    beta = float(beta)
    n_elem = pred.size
    if n_elem == 0:
        # Matches PyTorch: mean over an empty tensor is NaN.
        return jnp.asarray(jnp.nan, dtype=jnp.float32)

    pred_flat = pred.reshape(-1)
    targ_flat = target.reshape(-1)

    # Dtype-native sublane packing: 8 rows (f32), 16 (bf16/f16), 32 (int8/fp8).
    itemsize = jnp.dtype(pred.dtype).itemsize
    pack = SUBLANES * max(1, 4 // max(1, itemsize))

    rows = n_elem // LANES          # lane-aligned prefix
    aligned = rows * LANES
    tail = n_elem - aligned

    scale = beta if beta > 0.0 else 1.0

    g_tail = None
    if tail:
        # <128 leftover elements: tiny plain-JAX partial sum (no jnp.pad, no
        # extra HBM pass over the aligned prefix).
        g_tail = _plain_g_sum(pred_flat[aligned:], targ_flat[aligned:], beta)

    if rows < pack:
        # Too small to be worth a kernel launch: pure JAX for everything.
        total = _plain_g_sum(pred_flat[:aligned], targ_flat[:aligned], beta)
        if g_tail is not None:
            total = total + g_tail
        return (total / (scale * n_elem)).astype(jnp.float32)

    if tail:
        pred2d = pred_flat[:aligned].reshape(rows, LANES)
        targ2d = targ_flat[:aligned].reshape(rows, LANES)
    else:
        pred2d = pred_flat.reshape(rows, LANES)
        targ2d = targ_flat.reshape(rows, LANES)

    # Block size: multiple of the packing, capped so the double-buffered
    # footprint stays small even in v7x's 64 MiB VMEM.
    block_rows = int(block_rows)
    block_rows = max(pack, (min(block_rows, 8192, rows) // pack) * pack)

    n_cores = _num_tensorcores()
    try:
        partials = _launch(pred2d, targ2d, rows=rows, block_rows=block_rows,
                           beta=beta, n_cores=n_cores)
    except Exception:
        if n_cores == 1:
            raise
        # CORE_PARALLEL sharding unavailable on this toolchain; retry on one TC.
        partials = _launch(pred2d, targ2d, rows=rows, block_rows=block_rows,
                           beta=beta, n_cores=1)

    total = jnp.sum(partials)
    if g_tail is not None:
        total = total + g_tail
    return (total / (scale * n_elem)).astype(jnp.float32)


def smooth_huber_loss_ref(pred, target, beta=1.0):
    d = pred.astype(jnp.float32) - target.astype(jnp.float32)
    ad = jnp.abs(d)
    if beta > 0.0:
        loss = jnp.where(ad < beta, 0.5 * d * d / beta, ad - 0.5 * beta)
    else:
        loss = ad
    return jnp.mean(loss)


if __name__ == "__main__":
    key = jax.random.PRNGKey(0)
    k1, k2, k3, k4, k5, k6 = jax.random.split(key, 6)

    # Case 1: NCHW-style f32, lane-aligned (2*4*16*16 = 2048 elements).
    pred = jax.random.normal(k1, (2, 4, 16, 16), dtype=jnp.float32)
    target = jax.random.normal(k2, (2, 4, 16, 16), dtype=jnp.float32)
    out = jax.block_until_ready(smooth_huber_loss(pred, target, beta=1.0))
    ref = smooth_huber_loss_ref(pred, target, beta=1.0)
    assert jnp.allclose(out, ref, rtol=1e-5, atol=1e-6), (out, ref)

    # Case 2: ragged bf16 (2*3*33*33 = 6534 elements) — exercises the masked
    # partial last block and the plain-JAX <128-element tail path.
    pred2 = jax.random.normal(k3, (2, 3, 33, 33), dtype=jnp.bfloat16)
    target2 = jax.random.normal(k4, (2, 3, 33, 33), dtype=jnp.bfloat16)
    out2 = jax.block_until_ready(smooth_huber_loss(pred2, target2, beta=1.0))
    ref2 = smooth_huber_loss_ref(pred2, target2, beta=1.0)
    assert jnp.allclose(out2, ref2, rtol=1e-4, atol=1e-5), (out2, ref2)

    # Case 3: f32, small blocks + non-default beta — exercises multi-step
    # accumulation along the reduction axis and the single end-of-kernel
    # divide-by-beta scaling.
    pred3 = jax.random.normal(k5, (4, 8, 32, 16), dtype=jnp.float32)
    target3 = jax.random.normal(k6, (4, 8, 32, 16), dtype=jnp.float32)
    out3 = jax.block_until_ready(
        smooth_huber_loss(pred3, target3, beta=0.5, block_rows=32))
    ref3 = smooth_huber_loss_ref(pred3, target3, beta=0.5)
    assert jnp.allclose(out3, ref3, rtol=1e-5, atol=1e-6), (out3, ref3)

    print("KERNEL_OK")
</pallas_src>

<mosaic_0001>
module attributes {stable_mosaic.version = 11 : i64} {
  func.func @_huber_sum_kernel(%arg0: i32, %arg1: i32, %arg2: memref<16x128xf32, #tpu.memory_space<vmem>>, %arg3: memref<16x128xf32, #tpu.memory_space<vmem>>, %arg4: memref<8x128xf32, #tpu.memory_space<vmem>>) attributes {dimension_semantics = [#tpu.dimension_semantics<arbitrary>, #tpu.dimension_semantics<arbitrary>], iteration_bounds = array<i64: 1, 1>, scalar_prefetch = 0 : i64, scratch_operands = 0 : i64, tpu.core_type = #tpu.core_type<tc>, window_params = [{transform_indices = @transform_0, window_bounds = array<i64: 16, 128>}, {transform_indices = @transform_1, window_bounds = array<i64: 16, 128>}, {transform_indices = @transform_2, window_bounds = array<i64: 8, 128>}]} {
    %c0_i32 = arith.constant 0 : i32
    %0 = arith.cmpi eq, %arg1, %c0_i32 : i32
    %1 = arith.extui %0 : i1 to i32
    %c0_i32_0 = arith.constant 0 : i32
    %2 = arith.cmpi ne, %1, %c0_i32_0 : i32
    scf.if %2 {
      %cst_10 = arith.constant 0.000000e+00 : f32
      %18 = vector.broadcast %cst_10 : f32 to vector<8x128xf32>
      %c0_11 = arith.constant 0 : index
      %c0_12 = arith.constant 0 : index
      %19 = vector.load %arg4[%c0_11, %c0_12] : memref<8x128xf32, #tpu.memory_space<vmem>>, vector<8x128xf32>
      tpu.vector_store %arg4[%c0_11, %c0_12], %18 {strides = array<i32>} : memref<8x128xf32, #tpu.memory_space<vmem>>, vector<8x128xf32>,
    } else {
    }
    %c0 = arith.constant 0 : index
    %c0_1 = arith.constant 0 : index
    %3 = vector.load %arg2[%c0, %c0_1] : memref<16x128xf32, #tpu.memory_space<vmem>>, vector<16x128xf32>
    %c0_2 = arith.constant 0 : index
    %c0_3 = arith.constant 0 : index
    %4 = vector.load %arg3[%c0_2, %c0_3] : memref<16x128xf32, #tpu.memory_space<vmem>>, vector<16x128xf32>
    %5 = arith.subf %3, %4 : vector<16x128xf32>
    %6 = math.absf %5 : vector<16x128xf32>
    %cst = arith.constant 1.000000e+00 : f32
    %7 = vector.broadcast %cst : f32 to vector<16x128xf32>
    %8 = arith.minimumf %6, %7 : vector<16x128xf32>
    %cst_4 = arith.constant 5.000000e-01 : f32
    %9 = vector.broadcast %cst_4 : f32 to vector<16x128xf32>
    %10 = arith.mulf %9, %8 : vector<16x128xf32>
    %11 = arith.subf %6, %10 : vector<16x128xf32>
    %12 = arith.mulf %8, %11 : vector<16x128xf32>
    %c0_5 = arith.constant 0 : index
    %c0_6 = arith.constant 0 : index
    %13 = vector.load %arg4[%c0_5, %c0_6] : memref<8x128xf32, #tpu.memory_space<vmem>>, vector<8x128xf32>
    %14 = vector.shape_cast %12 : vector<16x128xf32> to vector<2x8x128xf32>
    %cst_7 = arith.constant dense<0.000000e+00> : vector<8x128xf32>
    %15 = vector.multi_reduction <add>, %14, %cst_7 [0] : vector<2x8x128xf32> to vector<8x128xf32>
    %16 = arith.addf %13, %15 : vector<8x128xf32>
    %c0_8 = arith.constant 0 : index
    %c0_9 = arith.constant 0 : index
    %17 = vector.load %arg4[%c0_8, %c0_9] : memref<8x128xf32, #tpu.memory_space<vmem>>, vector<8x128xf32>
    tpu.vector_store %arg4[%c0_8, %c0_9], %16 {strides = array<i32>} : memref<8x128xf32, #tpu.memory_space<vmem>>, vector<8x128xf32>,
    return
  }
  func.func @transform_0(%arg0: i32, %arg1: i32) -> (i32, i32) {
    %c1_i32 = arith.constant 1 : i32
    %0 = arith.muli %arg0, %c1_i32 : i32
    %1 = arith.addi %0, %arg1 : i32
    %c0_i32 = arith.constant 0 : i32
    %c0_i32_0 = arith.constant 0 : i32
    return %1, %c0_i32 : i32, i32
  }
  func.func @transform_1(%arg0: i32, %arg1: i32) -> (i32, i32) {
    %c1_i32 = arith.constant 1 : i32
    %0 = arith.muli %arg0, %c1_i32 : i32
    %1 = arith.addi %0, %arg1 : i32
    %c0_i32 = arith.constant 0 : i32
    %c0_i32_0 = arith.constant 0 : i32
    return %1, %c0_i32 : i32, i32
  }
  func.func @transform_2(%arg0: i32, %arg1: i32) -> (i32, i32) {
    %c0_i32 = arith.constant 0 : i32
    %c0_i32_0 = arith.constant 0 : i32
    return %arg0, %c0_i32 : i32, i32
  }
}

</mosaic_0001>

<llo_original>
// kernel: tpu_custom_call.1
$region0: #{tpu_custom_call.1}
  #allocation0 [shape = 'u32[]', space=smem, size = 0x4, offset = 0x4, fixed_abs, tag = 'smem constant byte address 0x4 - core index']
  #allocation1 [shape = 'u32[144,128]{1,0:T(1,128)}', space=vmem, size = 0x12000, scoped, tag = 'internal scratch']
  %s0 = inlined_call_operand.hbm [shape: f32[16,128], index: 0, kind: input, shape index: {}]
  %s1 = inlined_call_operand.hbm [shape: f32[16,128], index: 1, kind: input, shape index: {}]
  %s2 = inlined_call_operand.hbm [shape: f32[8,128], index: 2, kind: output, shape index: {}]
  %s3 = sld [smem:[#allocation0]]
  $region30: #{tpu_custom_call.1} parent=0
    _
  %s5 = ssub.s32 1, %s3
  %s6 = scalar_select 0, %s5, %s3
  $region1: #{tpu_custom_call.1} parent=0
    #allocation2 [shape = 'u8[8192]{0}', space=vmem, size = 0x2000, scoped, tag = 'input window, operand 0, single buffered']
    #allocation3 [shape = 's32[1]{0}', space=sflag, size = 0x4, scoped, tag = 'scoped memory for tpu_custom_call.1']
    #allocation4 [shape = 's32[1]{0}', space=sflag, size = 0x4, scoped, tag = 'scoped memory for tpu_custom_call.1']
    #allocation5 [shape = 'u8[8192]{0}', space=vmem, size = 0x2000, scoped, tag = 'input window, operand 1, single buffered']
    #allocation6 [shape = 's32[1]{0}', space=sflag, size = 0x4, scoped, tag = 'scoped memory for tpu_custom_call.1']
    #allocation7 [shape = 'u8[4096]{0}', space=vmem, size = 0x1000, scoped, tag = 'output window, operand 0, single buffered']
    %7 = vsyncpa [#allocation3], 0
    %8 = vsyncpa [#allocation6], 0
    %9 = vsyncpa [#allocation4], 0
    // Predicated region
    $region2: #{tpu_custom_call.1} parent=1 // pred_check
      _
    $region3: #{tpu_custom_call.1} parent=1 // pred_check_branch
      %11 = sbr.rel (0) target = $region5
    $region4: #{tpu_custom_call.1} parent=1 // pred_region
      %s12 = sadd.s32 0, 0
      %s13 = smul.u32 2, %s12
      %s15 = ssub.s32 256, 256
      %16 = vsyncadd [#allocation3], %s15
      %s17 = smul.addr %s13, 128
      %s18 = scalar_lea.hbm %s0, %s17
      %s19 = sshll.u32 [#allocation2], 4
      %s20 = int_to_ptr.vmem [resolvable:$true] %s19
      %25 = dma.hbm_to_vmem [thread:$0]  %s18, 256, %s20, [#allocation3], 128, 128, 8
    $region5: #{tpu_custom_call.1} parent=1 // pred_fallthru
      _
    // Predicated region
    $region6: #{tpu_custom_call.1} parent=1 // pred_check
      _
    $region7: #{tpu_custom_call.1} parent=1 // pred_check_branch
      %27 = sbr.rel (0) target = $region9
    $region8: #{tpu_custom_call.1} parent=1 // pred_region
      %s28 = sadd.s32 0, 0
      %s29 = smul.u32 2, %s28
      %s31 = ssub.s32 256, 256
      %32 = vsyncadd [#allocation6], %s31
      %s33 = smul.addr %s29, 128
      %s34 = scalar_lea.hbm %s1, %s33
      %s35 = sshll.u32 [#allocation5], 4
      %s36 = int_to_ptr.vmem [resolvable:$true] %s35
      %41 = dma.hbm_to_vmem [thread:$0]  %s34, 256, %s36, [#allocation6], 128, 128, 8
    $region9: #{tpu_custom_call.1} parent=1 // pred_fallthru
      _
    // Predicated region
    $region10: #{tpu_custom_call.1} parent=1 // pred_check
      _
    $region11: #{tpu_custom_call.1} parent=1 // pred_check_branch
      %43 = sbr.rel (0) target = $region13
    $region12: #{tpu_custom_call.1} parent=1 // pred_region
      %44 = dma.done [#allocation3], 256
    $region13: #{tpu_custom_call.1} parent=1 // pred_fallthru
      _
    // Predicated region
    $region14: #{tpu_custom_call.1} parent=1 // pred_check
      _
    $region15: #{tpu_custom_call.1} parent=1 // pred_check_branch
      %46 = sbr.rel (0) target = $region17
    $region16: #{tpu_custom_call.1} parent=1 // pred_region
      %47 = dma.done [#allocation6], 256
    $region17: #{tpu_custom_call.1} parent=1 // pred_fallthru
      _
    %s48 = sadd.s32 0, 0
    %s49 = smul.u32 2, %s48
    %s50 = sadd.s32 0, 0
    %s51 = smul.u32 2, %s50
    %p52 = scmp.eq.s32.totalorder 0, 0
    // Predicated region
    $region18: #{tpu_custom_call.1} parent=1 // pred_check
      %p53 = pneg %p52
    $region19: #{tpu_custom_call.1} parent=1 // pred_check_branch
      %55 = sbr.rel (%p53) target = $region21
    $region20: #{tpu_custom_call.1} parent=1 // pred_region
      %56 = vst [vmem:[#allocation7] sm:$0xff] 0.0
    $region21: #{tpu_custom_call.1} parent=1 // pred_fallthru
      _
    %v57 = vld [vmem:[#allocation2] sm:$0xff]
    %v58 = vld [vmem:[#allocation2 + $0x8] sm:$0xff]
    %v59 = vld [vmem:[#allocation5] sm:$0xff]
    %v60 = vld [vmem:[#allocation5 + $0x8] sm:$0xff]
    %v61 = vsub.f32 %v57, %v59
    %v62 = vsub.f32 %v58, %v60
    %v63 = vand.u32 2147483647, %v61
    %v64 = vand.u32 2147483647, %v62
    %v65 = vmin.f32 %v63, 1.0
    %v66 = vmin.f32 %v64, 1.0
    %v67 = vmul.f32 %v65, 0.5
    %v68 = vmul.f32 %v66, 0.5
    %v69 = vsub.f32 %v63, %v67
    %v70 = vsub.f32 %v64, %v68
    %v71 = vmul.f32 %v65, %v69
    %v72 = vmul.f32 %v66, %v70
    %v73 = vld [vmem:[#allocation7] sm:$0xff]
    %v74 = vadd.f32 %v71, %v72
    %v75 = vadd.f32 %v73, %v74
    %76 = vst [vmem:[#allocation7] sm:$0xff] %v75
    // Predicated region
    $region22: #{tpu_custom_call.1} parent=1 // pred_check
      _
    $region23: #{tpu_custom_call.1} parent=1 // pred_check_branch
      %78 = sbr.rel (0) target = $region25
    $region24: #{tpu_custom_call.1} parent=1 // pred_region
      %s80 = ssub.s32 128, 128
      %81 = vsyncadd [#allocation4], %s80
      %s83 = sshll.u32 [#allocation7], 4
      %s84 = int_to_ptr.vmem [resolvable:$true] %s83
      %86 = dma.vmem_to_hbm [thread:$0]  %s84, 128, %s2, [#allocation4]
    $region25: #{tpu_custom_call.1} parent=1 // pred_fallthru
      _
    // Predicated region
    $region26: #{tpu_custom_call.1} parent=1 // pred_check
      _
    $region27: #{tpu_custom_call.1} parent=1 // pred_check_branch
      %88 = sbr.rel (0) target = $region29
    $region28: #{tpu_custom_call.1} parent=1 // pred_region
      %89 = dma.done [#allocation4], 128
    $region29: #{tpu_custom_call.1} parent=1 // pred_fallthru
      _
    %90 = vsyncpa [#allocation3], 1
    %91 = vsyncpa [#allocation6], 1
    %92 = vsyncpa [#allocation4], 1

</llo_original>
